<compile_context>
chip_gen: v7x
topology: tpu7x:2x2x1
jax: 0.10.0
libtpu: 0.0.40
codegen_flags: <defaults>
</compile_context>

<pallas_src>
import jax
import jax.numpy as jnp
from jax.experimental import pallas as pl
from jax.experimental.pallas import tpu as pltpu

EPS = 1e-5          # PyTorch nn.LayerNorm default
SENT_PAD = 128      # lane-dense width for the tiny sent head
VOCAB_TILE = 1024   # vocab weight/bias padded once at init to a multiple of this


def _round_up(x, m):
    return ((x + m - 1) // m) * m


def _vmem_limit_bytes():
    """Scoped-VMEM limit: ~3/4 of physical VMEM, capped at 100 MiB.

    v5e/v6e (128 MiB physical) -> 96 MiB; v7x (64 MiB physical) -> 48 MiB,
    leaving headroom for Mosaic internal scratch and I/O double-buffers.
    """
    cap = None
    try:
        cap = getattr(pltpu.get_tpu_info(), "vmem_capacity_bytes", None)
    except Exception:
        cap = None
    if not cap:
        return 64 * 1024 * 1024
    return int(min(100 * 1024 * 1024, (cap * 3) // 4))


def _pick_tm(M, per_row_bytes, fixed_bytes, budget, tm_max=1024):
    """Largest 8-aligned row tile (<= round_up(M, 8)) whose VMEM estimate fits."""
    cap = min(tm_max, _round_up(M, 8))
    cands = sorted({c for c in (8, 16, 32, 64, 128, 256, 512, 1024, cap) if c <= cap})
    tm = cands[0]
    for c in cands:
        if fixed_bytes + c * per_row_bytes <= budget:
            tm = c
    return tm


# ---------------------------------------------------------------------------
# Shared in-kernel math
# ---------------------------------------------------------------------------
def _layernorm_f32(x, gamma, beta):
    mean = jnp.mean(x, axis=-1, keepdims=True)
    var = jnp.mean((x - mean) ** 2, axis=-1, keepdims=True)  # biased, like PyTorch
    return (x - mean) * jax.lax.rsqrt(var + EPS) * gamma + beta


def _head_z(x_ref, w1_ref, b1_ref, g_ref, be_ref):
    """LayerNorm(SiLU(x @ W1 + b1)); MXU operand dtype follows the weight dtype,
    accumulation and elementwise math stay f32 (v5e-friendly)."""
    cd = w1_ref.dtype
    h = jnp.dot(x_ref[...].astype(cd), w1_ref[...],
                preferred_element_type=jnp.float32)
    h = h + b1_ref[...].astype(jnp.float32)
    h = h * jax.nn.sigmoid(h)  # SiLU (EUP)
    return _layernorm_f32(h,
                          g_ref[...].astype(jnp.float32),
                          be_ref[...].astype(jnp.float32))


# ---------------------------------------------------------------------------
# Kernel 1: fused head -> (lane-padded) sent logits (used on both paths).
# ---------------------------------------------------------------------------
def head_sent_kernel(x_ref, w1_ref, b1_ref, g_ref, be_ref, ws_ref, bs_ref,
                     sent_ref):
    z = _head_z(x_ref, w1_ref, b1_ref, g_ref, be_ref)
    sent = jnp.dot(z.astype(ws_ref.dtype), ws_ref[...],
                   preferred_element_type=jnp.float32)
    sent_ref[...] = (sent + bs_ref[...].astype(jnp.float32)).astype(sent_ref.dtype)


# ---------------------------------------------------------------------------
# Kernel 2: fused head + vocab projection.
#   grid = (row_tiles, vocab_tiles); vocab is the inner ("arbitrary") axis.
#   z = LayerNorm(SiLU(x@W2+b2)) is computed once per row tile (j == 0) into a
#   resident VMEM scratch and reused for every vocab tile -> no HBM round trip
#   for the embedding and W_mlm streams only ceil(M/tm) times.
# ---------------------------------------------------------------------------
def head_mlm_kernel(x_ref, w2_ref, b2_ref, g_ref, be_ref, wm_ref, bm_ref,
                    out_ref, z_ref):
    @pl.when(pl.program_id(1) == 0)
    def _():
        z_ref[...] = _head_z(x_ref, w2_ref, b2_ref, g_ref, be_ref)

    o = jnp.dot(z_ref[...].astype(wm_ref.dtype), wm_ref[...],
                preferred_element_type=jnp.float32)
    out_ref[...] = (o + bm_ref[...].astype(jnp.float32)).astype(out_ref.dtype)


# ---------------------------------------------------------------------------
# pallas_call wrappers
# ---------------------------------------------------------------------------
def fused_head_sent(x, w1, b1, gamma, beta, ws_pad, bs_pad, *, out_dtype=None):
    M, E = x.shape
    SP = ws_pad.shape[1]
    out_dtype = jnp.dtype(out_dtype) if out_dtype is not None else x.dtype

    limit = _vmem_limit_bytes()
    budget = int(limit * 0.9)
    xb, wb, ob = x.dtype.itemsize, ws_pad.dtype.itemsize, out_dtype.itemsize
    fixed = (2 * E * E * w1.dtype.itemsize + 2 * 3 * E * 4
             + 2 * E * SP * wb + 2 * SP * wb + (2 << 20))
    per_row = 2 * E * xb + 2 * SP * ob
    tm = _pick_tm(M, per_row, fixed, budget)

    return pl.pallas_call(
        head_sent_kernel,
        out_shape=jax.ShapeDtypeStruct((M, SP), out_dtype),
        grid_spec=pltpu.PrefetchScalarGridSpec(
            num_scalar_prefetch=0,
            grid=(pl.cdiv(M, tm),),
            in_specs=[
                pl.BlockSpec((tm, E), lambda i: (i, 0)),
                pl.BlockSpec((E, E), lambda i: (0, 0)),
                pl.BlockSpec((1, E), lambda i: (0, 0)),
                pl.BlockSpec((1, E), lambda i: (0, 0)),
                pl.BlockSpec((1, E), lambda i: (0, 0)),
                pl.BlockSpec((E, SP), lambda i: (0, 0)),
                pl.BlockSpec((1, SP), lambda i: (0, 0)),
            ],
            out_specs=pl.BlockSpec((tm, SP), lambda i: (i, 0)),
        ),
        compiler_params=pltpu.CompilerParams(
            dimension_semantics=("parallel",),
            vmem_limit_bytes=limit),
    )(x, w1, b1, gamma, beta, ws_pad, bs_pad)


def fused_head_mlm(x, w2, b2, gamma, beta, wm_pad, bm_pad, vocab, *,
                   tn=VOCAB_TILE, out_dtype=None):
    M, E = x.shape
    Vp = wm_pad.shape[1]
    assert Vp % tn == 0, "w_mlm must be padded to a multiple of tn at init_params"
    out_dtype = jnp.dtype(out_dtype) if out_dtype is not None else x.dtype

    limit = _vmem_limit_bytes()
    budget = int(limit * 0.9)
    xb, wb, ob = x.dtype.itemsize, wm_pad.dtype.itemsize, out_dtype.itemsize
    fixed = (2 * E * E * w2.dtype.itemsize + 2 * 3 * E * 4
             + 2 * E * tn * wb + 2 * tn * wb + (2 << 20))
    per_row = 2 * E * xb + 2 * tn * ob + E * 4   # x block, out block, z scratch
    tm = _pick_tm(M, per_row, fixed, budget)
    # TODO(synk): for very large E (>=4096) f32 the resident (E,E) w2 block alone can
    # exceed v7x VMEM; add a K-reduction grid axis (tk,E blocks + f32 accumulator) or
    # require bf16 head weights there.  Optional v7x fp8 W_mlm also left unimplemented.

    return pl.pallas_call(
        head_mlm_kernel,
        # Output is written directly at the true vocab width; the ragged last
        # vocab/row blocks are masked by Pallas, so no post-kernel slice copy.
        out_shape=jax.ShapeDtypeStruct((M, vocab), out_dtype),
        grid_spec=pltpu.PrefetchScalarGridSpec(
            num_scalar_prefetch=0,
            grid=(pl.cdiv(M, tm), Vp // tn),
            in_specs=[
                pl.BlockSpec((tm, E), lambda i, j: (i, 0)),
                pl.BlockSpec((E, E), lambda i, j: (0, 0)),
                pl.BlockSpec((1, E), lambda i, j: (0, 0)),
                pl.BlockSpec((1, E), lambda i, j: (0, 0)),
                pl.BlockSpec((1, E), lambda i, j: (0, 0)),
                pl.BlockSpec((E, tn), lambda i, j: (0, j)),
                pl.BlockSpec((1, tn), lambda i, j: (0, j)),
            ],
            out_specs=pl.BlockSpec((tm, tn), lambda i, j: (i, j)),
            scratch_shapes=[pltpu.VMEM((tm, E), jnp.float32)],
        ),
        compiler_params=pltpu.CompilerParams(
            # Rows are "parallel" (megacore shards row tiles); the vocab axis must
            # stay "arbitrary" so every core sees j==0 for its resident z scratch.
            # TODO(synk): for tiny M on v7x a non-fused vocab-sharded variant would
            # keep both cores busy and stream W_mlm only once in total.
            dimension_semantics=("parallel", "arbitrary"),
            vmem_limit_bytes=limit),
    )(x, w2, b2, gamma, beta, wm_pad, bm_pad)


# ---------------------------------------------------------------------------
# Module wrapper (parameters + forward).
# ---------------------------------------------------------------------------
def init_params(key, embedding_dim, vocab=64001, n_sent=4, dtype=jnp.float32):
    ks = jax.random.split(key, 8)
    scale = 0.02
    E = embedding_dim
    SP = _round_up(n_sent, SENT_PAD)     # lane-dense sent head
    Vp = _round_up(vocab, VOCAB_TILE)    # pad vocab weight/bias ONCE here
    w_sent = jax.random.normal(ks[4], (E, n_sent), dtype) * scale
    b_sent = jax.random.normal(ks[5], (1, n_sent), dtype) * scale
    w_mlm = jax.random.normal(ks[6], (E, vocab), dtype) * scale
    b_mlm = jax.random.normal(ks[7], (1, vocab), dtype) * scale
    return {
        "w_fc1": jax.random.normal(ks[0], (E, E), dtype) * scale,
        "b_fc1": jax.random.normal(ks[1], (1, E), dtype) * scale,
        "w_fc2": jax.random.normal(ks[2], (E, E), dtype) * scale,
        "b_fc2": jax.random.normal(ks[3], (1, E), dtype) * scale,
        "g1": jnp.ones((1, E), dtype), "be1": jnp.zeros((1, E), dtype),
        "g2": jnp.ones((1, E), dtype), "be2": jnp.zeros((1, E), dtype),
        "w_sent": jnp.pad(w_sent, ((0, 0), (0, SP - n_sent))),
        "b_sent": jnp.pad(b_sent, ((0, 0), (0, SP - n_sent))),
        "w_mlm": jnp.pad(w_mlm, ((0, 0), (0, Vp - vocab))),
        "b_mlm": jnp.pad(b_mlm, ((0, 0), (0, Vp - vocab))),
    }


def cast_matmul_weights(params, dtype=jnp.bfloat16):
    """Cast only matmul weights (MXU operands) — biases/LayerNorm stay f32."""
    out = dict(params)
    for k in ("w_fc1", "w_fc2", "w_sent", "w_mlm"):
        out[k] = params[k].astype(dtype)
    return out


def linear1headmlm_forward(params, encoded, encoded2=None, mlm=False, *,
                           n_sent=4, vocab=64001, out_dtype=None):
    """out_dtype=None -> outputs match the activation dtype (pass bf16 activations
    and bf16 weights on v6e/v7x to halve x/logits HBM traffic; accumulation stays f32)."""
    B, S, E = encoded.shape
    x = encoded.reshape(B * S, E)
    sent_pad = fused_head_sent(x, params["w_fc1"], params["b_fc1"],
                               params["g1"], params["be1"],
                               params["w_sent"], params["b_sent"],
                               out_dtype=out_dtype)
    sent = sent_pad[:, :n_sent].reshape(B, S, n_sent)
    if not mlm:
        return sent
    x2 = encoded2.reshape(B * S, E)
    logits = fused_head_mlm(x2, params["w_fc2"], params["b_fc2"],
                            params["g2"], params["be2"],
                            params["w_mlm"], params["b_mlm"], vocab,
                            out_dtype=out_dtype)
    return sent, logits.reshape(B, S, vocab)


# Pure-JAX reference for verification (uses the unpadded views of the params).
def _ref_forward(params, encoded, encoded2, mlm, n_sent=4, vocab=64001):
    def head(x, w, b, g, be):
        h = x @ w.astype(jnp.float32) + b
        h = h * jax.nn.sigmoid(h)
        mean = h.mean(-1, keepdims=True)
        var = ((h - mean) ** 2).mean(-1, keepdims=True)
        return (h - mean) * jax.lax.rsqrt(var + EPS) * g + be

    z1 = head(encoded, params["w_fc1"], params["b_fc1"], params["g1"], params["be1"])
    sent = z1 @ params["w_sent"][:, :n_sent].astype(jnp.float32) + params["b_sent"][:, :n_sent]
    if not mlm:
        return sent
    z2 = head(encoded2, params["w_fc2"], params["b_fc2"], params["g2"], params["be2"])
    mlm_out = z2 @ params["w_mlm"][:, :vocab].astype(jnp.float32) + params["b_mlm"][:, :vocab]
    return sent, mlm_out


if __name__ == "__main__":
    B, S, E = 2, 8, 32
    vocab, n_sent = 64001, 4
    key = jax.random.PRNGKey(0)
    kp, k1, k2 = jax.random.split(key, 3)
    params = init_params(kp, E, vocab=vocab, n_sent=n_sent)
    encoded = jax.random.normal(k1, (B, S, E), jnp.float32)
    encoded2 = jax.random.normal(k2, (B, S, E), jnp.float32)

    # f32 path (exactness check against the pure-JAX reference).
    sent, mlm_logits = linear1headmlm_forward(params, encoded, encoded2, mlm=True,
                                              n_sent=n_sent, vocab=vocab)
    jax.block_until_ready((sent, mlm_logits))

    sent_ref, mlm_ref = _ref_forward(params, encoded, encoded2, True, n_sent, vocab)
    assert sent.shape == (B, S, n_sent) and mlm_logits.shape == (B, S, vocab)
    assert jnp.allclose(sent, sent_ref, atol=1e-4, rtol=1e-4)
    assert jnp.allclose(mlm_logits, mlm_ref, atol=1e-4, rtol=1e-4)

    # mlm=False path
    sent_only = linear1headmlm_forward(params, encoded, mlm=False,
                                       n_sent=n_sent, vocab=vocab)
    jax.block_until_ready(sent_only)
    assert jnp.allclose(sent_only, sent_ref, atol=1e-4, rtol=1e-4)

    # bf16 matmul-operand path (v6e/v7x fast path: bf16 MXU operands, f32 accum).
    params_bf16 = cast_matmul_weights(params, jnp.bfloat16)
    sent_b, mlm_b = linear1headmlm_forward(params_bf16, encoded, encoded2, mlm=True,
                                           n_sent=n_sent, vocab=vocab)
    jax.block_until_ready((sent_b, mlm_b))
    assert jnp.allclose(sent_b, sent_ref, atol=5e-2, rtol=5e-2)
    assert jnp.allclose(mlm_b, mlm_ref, atol=5e-2, rtol=5e-2)

    print("KERNEL_OK")
</pallas_src>

<mosaic_0001>
module attributes {stable_mosaic.version = 11 : i64} {
  func.func @head_sent_kernel(%arg0: i32, %arg1: memref<16x32xf32, #tpu.memory_space<vmem>>, %arg2: memref<32x32xf32, #tpu.memory_space<vmem>>, %arg3: memref<1x32xf32, #tpu.memory_space<vmem>>, %arg4: memref<1x32xf32, #tpu.memory_space<vmem>>, %arg5: memref<1x32xf32, #tpu.memory_space<vmem>>, %arg6: memref<32x128xf32, #tpu.memory_space<vmem>>, %arg7: memref<1x128xf32, #tpu.memory_space<vmem>>, %arg8: memref<16x128xf32, #tpu.memory_space<vmem>>) attributes {dimension_semantics = [#tpu.dimension_semantics<parallel>], iteration_bounds = array<i64: 1>, scalar_prefetch = 0 : i64, scratch_operands = 0 : i64, tpu.core_type = #tpu.core_type<tc>, window_params = [{transform_indices = @transform_0, window_bounds = array<i64: 16, 32>}, {pipeline_mode = #tpu.pipeline_mode<synchronous>, transform_indices = @transform_1, window_bounds = array<i64: 32, 32>}, {pipeline_mode = #tpu.pipeline_mode<synchronous>, transform_indices = @transform_2, window_bounds = array<i64: 1, 32>}, {pipeline_mode = #tpu.pipeline_mode<synchronous>, transform_indices = @transform_3, window_bounds = array<i64: 1, 32>}, {pipeline_mode = #tpu.pipeline_mode<synchronous>, transform_indices = @transform_4, window_bounds = array<i64: 1, 32>}, {pipeline_mode = #tpu.pipeline_mode<synchronous>, transform_indices = @transform_5, window_bounds = array<i64: 32, 128>}, {pipeline_mode = #tpu.pipeline_mode<synchronous>, transform_indices = @transform_6, window_bounds = array<i64: 1, 128>}, {transform_indices = @transform_7, window_bounds = array<i64: 16, 128>}]} {
    %c0 = arith.constant 0 : index
    %c0_0 = arith.constant 0 : index
    %0 = vector.load %arg1[%c0, %c0_0] : memref<16x32xf32, #tpu.memory_space<vmem>>, vector<16x32xf32>
    %c0_1 = arith.constant 0 : index
    %c0_2 = arith.constant 0 : index
    %1 = vector.load %arg2[%c0_1, %c0_2] : memref<32x32xf32, #tpu.memory_space<vmem>>, vector<32x32xf32>
    %cst = arith.constant dense<0.000000e+00> : vector<16x32xf32>
    %2 = tpu.matmul %0, %1, %cst {dimension_numbers = #tpu.dot_dimension_numbers<[1], [0], [0], [1], [0, 0, 1, 1], [], []>} : vector<16x32xf32>, vector<32x32xf32>, vector<16x32xf32> -> vector<16x32xf32>
    %c0_3 = arith.constant 0 : index
    %c0_4 = arith.constant 0 : index
    %3 = vector.load %arg3[%c0_3, %c0_4] : memref<1x32xf32, #tpu.memory_space<vmem>>, vector<1x32xf32>
    %4 = vector.broadcast %3 : vector<1x32xf32> to vector<16x32xf32>
    %5 = arith.addf %2, %4 : vector<16x32xf32>
    %6 = arith.negf %5 : vector<16x32xf32>
    %7 = math.exp %6 : vector<16x32xf32>
    %cst_5 = arith.constant 1.000000e+00 : f32
    %8 = vector.broadcast %cst_5 : f32 to vector<16x32xf32>
    %9 = arith.addf %8, %7 : vector<16x32xf32>
    %10 = arith.divf %8, %9 : vector<16x32xf32>
    %11 = arith.mulf %5, %10 : vector<16x32xf32>
    %c0_6 = arith.constant 0 : index
    %c0_7 = arith.constant 0 : index
    %12 = vector.load %arg4[%c0_6, %c0_7] : memref<1x32xf32, #tpu.memory_space<vmem>>, vector<1x32xf32>
    %c0_8 = arith.constant 0 : index
    %c0_9 = arith.constant 0 : index
    %13 = vector.load %arg5[%c0_8, %c0_9] : memref<1x32xf32, #tpu.memory_space<vmem>>, vector<1x32xf32>
    %cst_10 = arith.constant dense<0.000000e+00> : vector<16xf32>
    %14 = vector.multi_reduction <add>, %11, %cst_10 [1] : vector<16x32xf32> to vector<16xf32>
    %15 = vector.shape_cast %14 : vector<16xf32> to vector<16x1xf32>
    %cst_11 = arith.constant 3.200000e+01 : f32
    %16 = vector.broadcast %cst_11 : f32 to vector<16x1xf32>
    %17 = arith.divf %15, %16 : vector<16x1xf32>
    %18 = vector.broadcast %17 : vector<16x1xf32> to vector<16x32xf32>
    %19 = arith.subf %11, %18 : vector<16x32xf32>
    %20 = arith.mulf %19, %19 : vector<16x32xf32>
    %cst_12 = arith.constant dense<0.000000e+00> : vector<16xf32>
    %21 = vector.multi_reduction <add>, %20, %cst_12 [1] : vector<16x32xf32> to vector<16xf32>
    %22 = vector.shape_cast %21 : vector<16xf32> to vector<16x1xf32>
    %cst_13 = arith.constant 3.200000e+01 : f32
    %23 = vector.broadcast %cst_13 : f32 to vector<16x1xf32>
    %24 = arith.divf %22, %23 : vector<16x1xf32>
    %25 = vector.broadcast %17 : vector<16x1xf32> to vector<16x32xf32>
    %26 = arith.subf %11, %25 : vector<16x32xf32>
    %cst_14 = arith.constant 9.99999974E-6 : f32
    %27 = vector.broadcast %cst_14 : f32 to vector<16x1xf32>
    %28 = arith.addf %24, %27 : vector<16x1xf32>
    %29 = math.rsqrt %28 : vector<16x1xf32>
    %30 = vector.broadcast %29 : vector<16x1xf32> to vector<16x32xf32>
    %31 = arith.mulf %26, %30 : vector<16x32xf32>
    %32 = vector.broadcast %12 : vector<1x32xf32> to vector<16x32xf32>
    %33 = arith.mulf %31, %32 : vector<16x32xf32>
    %34 = vector.broadcast %13 : vector<1x32xf32> to vector<16x32xf32>
    %35 = arith.addf %33, %34 : vector<16x32xf32>
    %c0_15 = arith.constant 0 : index
    %c0_16 = arith.constant 0 : index
    %36 = vector.load %arg6[%c0_15, %c0_16] : memref<32x128xf32, #tpu.memory_space<vmem>>, vector<32x128xf32>
    %cst_17 = arith.constant dense<0.000000e+00> : vector<16x128xf32>
    %37 = tpu.matmul %35, %36, %cst_17 {dimension_numbers = #tpu.dot_dimension_numbers<[1], [0], [0], [1], [0, 0, 1, 1], [], []>} : vector<16x32xf32>, vector<32x128xf32>, vector<16x128xf32> -> vector<16x128xf32>
    %c0_18 = arith.constant 0 : index
    %c0_19 = arith.constant 0 : index
    %38 = vector.load %arg7[%c0_18, %c0_19] : memref<1x128xf32, #tpu.memory_space<vmem>>, vector<1x128xf32>
    %39 = vector.broadcast %38 : vector<1x128xf32> to vector<16x128xf32>
    %40 = arith.addf %37, %39 : vector<16x128xf32>
    %c0_20 = arith.constant 0 : index
    %c0_21 = arith.constant 0 : index
    %41 = vector.load %arg8[%c0_20, %c0_21] : memref<16x128xf32, #tpu.memory_space<vmem>>, vector<16x128xf32>
    tpu.vector_store %arg8[%c0_20, %c0_21], %40 {strides = array<i32>} : memref<16x128xf32, #tpu.memory_space<vmem>>, vector<16x128xf32>,
    return
  }
  func.func @transform_0(%arg0: i32) -> (i32, i32) {
    %c0_i32 = arith.constant 0 : i32
    %c0_i32_0 = arith.constant 0 : i32
    return %arg0, %c0_i32 : i32, i32
  }
  func.func @transform_1(%arg0: i32) -> (i32, i32) {
    %c0_i32 = arith.constant 0 : i32
    %c0_i32_0 = arith.constant 0 : i32
    %c0_i32_1 = arith.constant 0 : i32
    return %c0_i32, %c0_i32_0 : i32, i32
  }
  func.func @transform_2(%arg0: i32) -> (i32, i32) {
    %c0_i32 = arith.constant 0 : i32
    %c0_i32_0 = arith.constant 0 : i32
    %c0_i32_1 = arith.constant 0 : i32
    return %c0_i32, %c0_i32_0 : i32, i32
  }
  func.func @transform_3(%arg0: i32) -> (i32, i32) {
    %c0_i32 = arith.constant 0 : i32
    %c0_i32_0 = arith.constant 0 : i32
    %c0_i32_1 = arith.constant 0 : i32
    return %c0_i32, %c0_i32_0 : i32, i32
  }
  func.func @transform_4(%arg0: i32) -> (i32, i32) {
    %c0_i32 = arith.constant 0 : i32
    %c0_i32_0 = arith.constant 0 : i32
    %c0_i32_1 = arith.constant 0 : i32
    return %c0_i32, %c0_i32_0 : i32, i32
  }
  func.func @transform_5(%arg0: i32) -> (i32, i32) {
    %c0_i32 = arith.constant 0 : i32
    %c0_i32_0 = arith.constant 0 : i32
    %c0_i32_1 = arith.constant 0 : i32
    return %c0_i32, %c0_i32_0 : i32, i32
  }
  func.func @transform_6(%arg0: i32) -> (i32, i32) {
    %c0_i32 = arith.constant 0 : i32
    %c0_i32_0 = arith.constant 0 : i32
    %c0_i32_1 = arith.constant 0 : i32
    return %c0_i32, %c0_i32_0 : i32, i32
  }
  func.func @transform_7(%arg0: i32) -> (i32, i32) {
    %c0_i32 = arith.constant 0 : i32
    %c0_i32_0 = arith.constant 0 : i32
    return %arg0, %c0_i32 : i32, i32
  }
}

</mosaic_0001>

<llo_original>
// kernel: tpu_custom_call.1
$region0: #{tpu_custom_call.1}
  #allocation0 [shape = 'u32[]', space=smem, size = 0x4, offset = 0x4, fixed_abs, tag = 'smem constant byte address 0x4 - core index']
  #allocation1 [shape = 'u32[144,128]{1,0:T(1,128)}', space=vmem, size = 0x12000, scoped, tag = 'internal scratch']
  %s0 = inlined_call_operand.hbm [shape: f32[16,32], index: 0, kind: input, shape index: {}]
  %s1 = inlined_call_operand.hbm [shape: f32[32,32], index: 1, kind: input, shape index: {}]
  %s2 = inlined_call_operand.hbm [shape: f32[1,32], index: 2, kind: input, shape index: {}]
  %s3 = inlined_call_operand.hbm [shape: f32[1,32], index: 3, kind: input, shape index: {}]
  %s4 = inlined_call_operand.hbm [shape: f32[1,32], index: 4, kind: input, shape index: {}]
  %s5 = inlined_call_operand.hbm [shape: f32[32,128], index: 5, kind: input, shape index: {}]
  %s6 = inlined_call_operand.hbm [shape: f32[1,128], index: 6, kind: input, shape index: {}]
  %s7 = inlined_call_operand.hbm [shape: f32[16,128], index: 7, kind: output, shape index: {}]
  %s8 = sld [smem:[#allocation0]]
  $region66: #{tpu_custom_call.1} parent=0
    _
  %s10 = ssub.s32 1, %s8
  %s11 = scalar_select 0, %s10, %s8
  $region1: #{tpu_custom_call.1} parent=0
    #allocation2 [shape = 'u8[8192]{0}', space=vmem, size = 0x2000, scoped, tag = 'input window, operand 0, single buffered']
    #allocation3 [shape = 's32[1]{0}', space=sflag, size = 0x4, scoped, tag = 'scoped memory for tpu_custom_call.1']
    #allocation4 [shape = 's32[1]{0}', space=sflag, size = 0x4, scoped, tag = 'scoped memory for tpu_custom_call.1']
    #allocation5 [shape = 'u8[16384]{0}', space=vmem, size = 0x4000, scoped, tag = 'input window, operand 1, single buffered']
    #allocation6 [shape = 's32[1]{0}', space=sflag, size = 0x4, scoped, tag = 'scoped memory for tpu_custom_call.1']
    #allocation7 [shape = 'u8[512]{0}', space=vmem, size = 0x400, scoped, tag = 'input window, operand 2, single buffered']
    #allocation8 [shape = 'u8[512]{0}', space=vmem, size = 0x400, scoped, tag = 'input window, operand 3, single buffered']
    #allocation9 [shape = 's32[1]{0}', space=sflag, size = 0x4, scoped, tag = 'scoped memory for tpu_custom_call.1']
    #allocation10 [shape = 'u8[512]{0}', space=vmem, size = 0x400, scoped, tag = 'input window, operand 4, single buffered']
    #allocation11 [shape = 'u8[16384]{0}', space=vmem, size = 0x4000, scoped, tag = 'input window, operand 5, single buffered']
    #allocation12 [shape = 's32[1]{0}', space=sflag, size = 0x4, scoped, tag = 'scoped memory for tpu_custom_call.1']
    #allocation13 [shape = 'u8[512]{0}', space=vmem, size = 0x400, scoped, tag = 'input window, operand 6, single buffered']
    #allocation14 [shape = 'u8[8192]{0}', space=vmem, size = 0x2000, scoped, tag = 'output window, operand 0, single buffered']
    %12 = vsyncpa [#allocation3], 0
    %13 = vsyncpa [#allocation6], 0
    %14 = vsyncpa [#allocation9], 0
    %15 = vsyncpa [#allocation12], 0
    %16 = vsyncpa [#allocation4], 0
    // Predicated region
    $region2: #{tpu_custom_call.1} parent=1 // pred_check
      _
    $region3: #{tpu_custom_call.1} parent=1 // pred_check_branch
      %18 = sbr.rel (0) target = $region5
    $region4: #{tpu_custom_call.1} parent=1 // pred_region
      %s20 = ssub.s32 256, 256
      %21 = vsyncadd [#allocation3], %s20
      %s22 = sshll.u32 [#allocation2], 4
      %s23 = int_to_ptr.vmem [resolvable:$true] %s22
      %28 = dma.hbm_to_vmem [thread:$0]  %s0, 256, %s23, [#allocation3], 128, 128, 8
    $region5: #{tpu_custom_call.1} parent=1 // pred_fallthru
      _
    // Predicated region
    $region6: #{tpu_custom_call.1} parent=1 // pred_check
      _
    $region7: #{tpu_custom_call.1} parent=1 // pred_check_branch
      %30 = sbr.rel (0) target = $region9
    $region8: #{tpu_custom_call.1} parent=1 // pred_region
      %s32 = ssub.s32 512, 512
      %33 = vsyncadd [#allocation6], %s32
      %s34 = sshll.u32 [#allocation5], 4
      %s35 = int_to_ptr.vmem [resolvable:$true] %s34
      %40 = dma.hbm_to_vmem [thread:$0]  %s1, 512, %s35, [#allocation6], 128, 128, 8
    $region9: #{tpu_custom_call.1} parent=1 // pred_fallthru
      _
    // Predicated region
    $region10: #{tpu_custom_call.1} parent=1 // pred_check
      _
    $region11: #{tpu_custom_call.1} parent=1 // pred_check_branch
      %42 = sbr.rel (0) target = $region13
    $region12: #{tpu_custom_call.1} parent=1 // pred_region
      %s44 = ssub.s32 16, 16
      %45 = vsyncadd [#allocation6], %s44
      %s47 = sshll.u32 [#allocation7], 4
      %s48 = int_to_ptr.vmem [resolvable:$true] %s47
      %50 = dma.hbm_to_vmem [thread:$0]  %s2, 16, %s48, [#allocation6]
    $region13: #{tpu_custom_call.1} parent=1 // pred_fallthru
      _
    // Predicated region
    $region14: #{tpu_custom_call.1} parent=1 // pred_check
      _
    $region15: #{tpu_custom_call.1} parent=1 // pred_check_branch
      %52 = sbr.rel (0) target = $region17
    $region16: #{tpu_custom_call.1} parent=1 // pred_region
      %s54 = ssub.s32 16, 16
      %55 = vsyncadd [#allocation9], %s54
      %s57 = sshll.u32 [#allocation8], 4
      %s58 = int_to_ptr.vmem [resolvable:$true] %s57
      %60 = dma.hbm_to_vmem [thread:$0]  %s3, 16, %s58, [#allocation9]
    $region17: #{tpu_custom_call.1} parent=1 // pred_fallthru
      _
    // Predicated region
    $region18: #{tpu_custom_call.1} parent=1 // pred_check
      _
    $region19: #{tpu_custom_call.1} parent=1 // pred_check_branch
      %62 = sbr.rel (0) target = $region21
    $region20: #{tpu_custom_call.1} parent=1 // pred_region
      %s64 = ssub.s32 16, 16
      %65 = vsyncadd [#allocation9], %s64
      %s67 = sshll.u32 [#allocation10], 4
      %s68 = int_to_ptr.vmem [resolvable:$true] %s67
      %70 = dma.hbm_to_vmem [thread:$0]  %s4, 16, %s68, [#allocation9]
    $region21: #{tpu_custom_call.1} parent=1 // pred_fallthru
      _
    // Predicated region
    $region22: #{tpu_custom_call.1} parent=1 // pred_check
      _
    $region23: #{tpu_custom_call.1} parent=1 // pred_check_branch
      %72 = sbr.rel (0) target = $region25
    $region24: #{tpu_custom_call.1} parent=1 // pred_region
      %s74 = ssub.s32 512, 512
      %75 = vsyncadd [#allocation12], %s74
      %s76 = sshll.u32 [#allocation11], 4
      %s77 = int_to_ptr.vmem [resolvable:$true] %s76
      %82 = dma.hbm_to_vmem [thread:$0]  %s5, 512, %s77, [#allocation12], 128, 128, 8
    $region25: #{tpu_custom_call.1} parent=1 // pred_fallthru
      _
    // Predicated region
    $region26: #{tpu_custom_call.1} parent=1 // pred_check
      _
    $region27: #{tpu_custom_call.1} parent=1 // pred_check_branch
      %84 = sbr.rel (0) target = $region29
    $region28: #{tpu_custom_call.1} parent=1 // pred_region
      %s86 = ssub.s32 16, 16
      %87 = vsyncadd [#allocation12], %s86
      %s89 = sshll.u32 [#allocation13], 4
      %s90 = int_to_ptr.vmem [resolvable:$true] %s89
      %92 = dma.hbm_to_vmem [thread:$0]  %s6, 16, %s90, [#allocation12]
    $region29: #{tpu_custom_call.1} parent=1 // pred_fallthru
      _
    // Predicated region
    $region30: #{tpu_custom_call.1} parent=1 // pred_check
      _
    $region31: #{tpu_custom_call.1} parent=1 // pred_check_branch
      %94 = sbr.rel (0) target = $region33
    $region32: #{tpu_custom_call.1} parent=1 // pred_region
      %95 = dma.done [#allocation3], 256
    $region33: #{tpu_custom_call.1} parent=1 // pred_fallthru
      _
    // Predicated region
    $region34: #{tpu_custom_call.1} parent=1 // pred_check
      _
    $region35: #{tpu_custom_call.1} parent=1 // pred_check_branch
      %97 = sbr.rel (0) target = $region37
    $region36: #{tpu_custom_call.1} parent=1 // pred_region
      %98 = dma.done [#allocation6], 512
    $region37: #{tpu_custom_call.1} parent=1 // pred_fallthru
      _
    // Predicated region
    $region38: #{tpu_custom_call.1} parent=1 // pred_check
      _
    $region39: #{tpu_custom_call.1} parent=1 // pred_check_branch
      %100 = sbr.rel (0) target = $region41
    $region40: #{tpu_custom_call.1} parent=1 // pred_region
      %101 = dma.done [#allocation6], 16
    $region41: #{tpu_custom_call.1} parent=1 // pred_fallthru
      _
    // Predicated region
    $region42: #{tpu_custom_call.1} parent=1 // pred_check
      _
    $region43: #{tpu_custom_call.1} parent=1 // pred_check_branch
      %103 = sbr.rel (0) target = $region45
    $region44: #{tpu_custom_call.1} parent=1 // pred_region
      %104 = dma.done [#allocation9], 16
    $region45: #{tpu_custom_call.1} parent=1 // pred_fallthru
      _
    // Predicated region
    $region46: #{tpu_custom_call.1} parent=1 // pred_check
      _
    $region47: #{tpu_custom_call.1} parent=1 // pred_check_branch
      %106 = sbr.rel (0) target = $region49
    $region48: #{tpu_custom_call.1} parent=1 // pred_region
      %107 = dma.done [#allocation9], 16
    $region49: #{tpu_custom_call.1} parent=1 // pred_fallthru
      _
    // Predicated region
    $region50: #{tpu_custom_call.1} parent=1 // pred_check
      _
    $region51: #{tpu_custom_call.1} parent=1 // pred_check_branch
      %109 = sbr.rel (0) target = $region53
    $region52: #{tpu_custom_call.1} parent=1 // pred_region
      %110 = dma.done [#allocation12], 512
    $region53: #{tpu_custom_call.1} parent=1 // pred_fallthru
      _
    // Predicated region
    $region54: #{tpu_custom_call.1} parent=1 // pred_check
      _
    $region55: #{tpu_custom_call.1} parent=1 // pred_check_branch
      %112 = sbr.rel (0) target = $region57
    $region56: #{tpu_custom_call.1} parent=1 // pred_region
      %113 = dma.done [#allocation12], 16
    $region57: #{tpu_custom_call.1} parent=1 // pred_fallthru
      _
    %v114 = vld [vmem:[#allocation2] sm:$0xff]
    %v115 = vld [vmem:[#allocation2 + $0x8] sm:$0xff]
    %v116 = vld [vmem:[#allocation5] sm:$0xff]
    %v117 = vld [vmem:[#allocation5 + $0x8] sm:$0xff]
    %v118 = vld [vmem:[#allocation5 + $0x10] sm:$0xff]
    %v119 = vld [vmem:[#allocation5 + $0x18] sm:$0xff]
    %v120 = vld [vmem:[#allocation7] sm:$0x1]
    %v122 = vlaneseq
    %v123 = vshrl.u32 %v122, 7
    %v124 = vsub.s32 0, %v123
    %v125 = vrot.slane %v120, %v124
    %vm127 = vcmask 261120
    %v129 = vsel %vm127, %v114, 0
    %v132 = vsel %vm127, %v115, 0
    %134 = vmatprep.subr.mxu0 0.0
    %135 = vmatpush1.msra.mxu0 %v116
    %136 = vmatprep.subr.mxu0 0.0
    %137 = vmatpush1.msra.mxu0 %v117
    %138 = vmatprep.subr.mxu0 0.0
    %139 = vmatpush1.msra.mxu0 %v118
    %140 = vmatprep.subr.mxu0 0.0
    %141 = vmatpush1.msra.mxu0 %v119
    %142 = vmatprep.subr.mxu0 0.0
    %143 = vmatpush1.msra.mxu0 0.0
    %144 = vmatprep.subr.mxu0 0.0
    %145 = vmatpush1.msra.mxu0 0.0
    %146 = vmatprep.subr.mxu0 0.0
    %147 = vmatpush1.msra.mxu0 0.0
    %148 = vmatprep.subr.mxu0 0.0
    %149 = vmatpush1.msra.mxu0 0.0
    %150 = vmatprep.subr.mxu0 0.0
    %151 = vmatpush1.msra.mxu0 0.0
    %152 = vmatprep.subr.mxu0 0.0
    %153 = vmatpush1.msra.mxu0 0.0
    %154 = vmatprep.subr.mxu0 0.0
    %155 = vmatpush1.msra.mxu0 0.0
    %156 = vmatprep.subr.mxu0 0.0
    %157 = vmatpush1.msra.mxu0 0.0
    %158 = vmatprep.subr.mxu0 0.0
    %159 = vmatpush1.msra.mxu0 0.0
    %160 = vmatprep.subr.mxu0 0.0
    %161 = vmatpush1.msra.mxu0 0.0
    %162 = vmatprep.subr.mxu0 0.0
    %163 = vmatpush1.msra.mxu0 0.0
    %164 = vmatprep.subr.mxu0 0.0
    %165 = vmatpush1.msra.mxu0 0.0
    %166 = vmatprep.subr.mxu0 0.0
    %167 = vmatpush1.msra.mxu0 0.0
    %168 = vmatprep.subr.mxu0 0.0
    %169 = vmatpush1.msra.mxu0 0.0
    %170 = vmatprep.subr.mxu0 0.0
    %171 = vmatpush1.msra.mxu0 0.0
    %172 = vmatprep.subr.mxu0 0.0
    %173 = vmatpush1.msra.mxu0 0.0
    %174 = vmatprep.subr.mxu0 0.0
    %175 = vmatpush1.msra.mxu0 0.0
    %176 = vmatprep.subr.mxu0 0.0
    %177 = vmatpush1.msra.mxu0 0.0
    %178 = vmatprep.subr.mxu0 0.0
    %179 = vmatpush1.msra.mxu0 0.0
    %180 = vmatprep.subr.mxu0 0.0
    %181 = vmatpush1.msra.mxu0 0.0
    %182 = vmatprep.subr.mxu0 0.0
    %183 = vmatpush1.msra.mxu0 0.0
    %184 = vmatprep.subr.mxu0 0.0
    %185 = vmatpush1.msra.mxu0 0.0
    %186 = vmatprep.subr.mxu0 0.0
    %187 = vmatpush1.msra.mxu0 0.0
    %188 = vmatprep.subr.mxu0 0.0
    %189 = vmatpush1.msra.mxu0 0.0
    %190 = vmatprep.subr.mxu0 0.0
    %191 = vmatpush1.msra.mxu0 0.0
    %192 = vmatprep.subr.mxu0 0.0
    %193 = vmatpush1.msra.mxu0 0.0
    %194 = vmatprep.subr.mxu0 0.0
    %195 = vmatpush1.msra.mxu0 0.0
    %196 = vmatprep.subr.mxu0 0.0
    %197 = vmatpush1.msra.mxu0 0.0
    %198 = vmatprep.mubr.f32.mxu0 0.0
    %199 = vmatmul.mubr.f32.gmra.mrb[0].mxu0 %v129
    %v200 = vpop.f32.mrb[0].mxu0
    %v201 = vadd.f32 %v125, %v200
    %v202 = vpop.f32.mrb[0].mxu0
    %203 = vmatprep.mubr.f32.mxu0 0.0
    %204 = vmatmul.mubr.f32.gmra.mrb[0].mxu0 %v132
    %v205 = vpop.f32.mrb[0].mxu0
    %v206 = vadd.f32 %v125, %v205
    %v207 = vpop.f32.mrb[0].mxu0
    %208 = vdwg.mxu0
    %v209 = vxor.u32 %v201, 2147483648
    %v210 = vxor.u32 %v206, 2147483648
    %v211 = vmul.f32 %v209, 1.442695
    %v212 = vpow.pop %v211
    %v213 = vmul.f32 %v210, 1.442695
    %v214 = vpow.pop %v213
    %v215 = vadd.f32 %v212, 1.0
    %v216 = vadd.f32 %v214, 1.0
    %v217 = vrcp.pop %v215
    %v218 = vmul.f32 1.0, %v217
    %v219 = vrcp.pop %v216
    %v220 = vmul.f32 1.0, %v219
    %v221 = vmul.f32 %v201, %v218
    %v222 = vmul.f32 %v206, %v220
    %v223 = vld [vmem:[#allocation8] sm:$0x1]
    %v224 = vld [vmem:[#allocation10] sm:$0x1]
    %v225 = vsel %vm127, %v221, 0.0
    %226 = vadd.xlane.f32.xlu0 %v225
    %v227 = vpop.xlane.xlu0 %226
    %v228 = vsel %vm127, %v222, 0.0
    %229 = vadd.xlane.f32.xlu0 %v228
    %v230 = vpop.xlane.xlu0 %229
    %v231 = vrcp.pop 32.0
    %v232 = vmul.f32 %v227, %v231
    %v233 = vmul.f32 %v230, %v231
    %v234 = vsub.f32 %v221, %v232
    %v235 = vsub.f32 %v222, %v233
    %v236 = vmul.f32 %v234, %v234
    %v237 = vmul.f32 %v235, %v235
    %v238 = vsel %vm127, %v236, 0.0
    %239 = vadd.xlane.f32.xlu0 %v238
    %v240 = vpop.xlane.xlu0 %239
    %v241 = vsel %vm127, %v237, 0.0
    %242 = vadd.xlane.f32.xlu0 %v241
    %v243 = vpop.xlane.xlu0 %242
    %v244 = vmul.f32 %v240, %v231
    %v245 = vmul.f32 %v243, %v231
    %v246 = vadd.f32 %v244, 1e-05
    %v247 = vadd.f32 %v245, 1e-05
    %v248 = vrsqrt.pop %v246
    %v249 = vrsqrt.pop %v247
    %v250 = vmul.f32 %v234, %v248
    %v251 = vmul.f32 %v235, %v249
    %v253 = vlaneseq
    %v254 = vshrl.u32 %v253, 7
    %v255 = vsub.s32 0, %v254
    %v256 = vrot.slane %v223, %v255
    %v258 = vmul.f32 %v250, %v256
    %v259 = vmul.f32 %v251, %v256
    %v261 = vlaneseq
    %v262 = vshrl.u32 %v261, 7
    %v263 = vsub.s32 0, %v262
    %v264 = vrot.slane %v224, %v263
    %v266 = vadd.f32 %v258, %v264
    %v267 = vadd.f32 %v259, %v264
    %v268 = vld [vmem:[#allocation11] sm:$0xff]
    %v269 = vld [vmem:[#allocation11 + $0x8] sm:$0xff]
    %v270 = vld [vmem:[#allocation11 + $0x10] sm:$0xff]
    %v271 = vld [vmem:[#allocation11 + $0x18] sm:$0xff]
    %v272 = vld [vmem:[#allocation13] sm:$0x1]
    %v274 = vlaneseq
    %v275 = vshrl.u32 %v274, 7
    %v276 = vsub.s32 0, %v275
    %v277 = vrot.slane %v272, %v276
    %v280 = vsel %vm127, %v266, 0
    %v283 = vsel %vm127, %v267, 0
    %285 = vmatprep.subr.mxu0 0.0
    %286 = vmatpush1.msra.mxu0 %v268
    %287 = vmatprep.subr.mxu0 0.0
    %288 = vmatpush1.msra.mxu0 %v269
    %289 = vmatprep.subr.mxu0 0.0
    %290 = vmatpush1.msra.mxu0 %v270
    %291 = vmatprep.subr.mxu0 0.0
    %292 = vmatpush1.msra.mxu0 %v271
    %293 = vmatprep.subr.mxu0 0.0
    %294 = vmatpush1.msra.mxu0 0.0
    %295 = vmatprep.subr.mxu0 0.0
    %296 = vmatpush1.msra.mxu0 0.0
    %297 = vmatprep.subr.mxu0 0.0
    %298 = vmatpush1.msra.mxu0 0.0
    %299 = vmatprep.subr.mxu0 0.0
    %300 = vmatpush1.msra.mxu0 0.0
    %301 = vmatprep.subr.mxu0 0.0
    %302 = vmatpush1.msra.mxu0 0.0
    %303 = vmatprep.subr.mxu0 0.0
    %304 = vmatpush1.msra.mxu0 0.0
    %305 = vmatprep.subr.mxu0 0.0
    %306 = vmatpush1.msra.mxu0 0.0
    %307 = vmatprep.subr.mxu0 0.0
    %308 = vmatpush1.msra.mxu0 0.0
    %309 = vmatprep.subr.mxu0 0.0
    %310 = vmatpush1.msra.mxu0 0.0
    %311 = vmatprep.subr.mxu0 0.0
    %312 = vmatpush1.msra.mxu0 0.0
    %313 = vmatprep.subr.mxu0 0.0
    %314 = vmatpush1.msra.mxu0 0.0
    %315 = vmatprep.subr.mxu0 0.0
    %316 = vmatpush1.msra.mxu0 0.0
    %317 = vmatprep.subr.mxu0 0.0
    %318 = vmatpush1.msra.mxu0 0.0
    %319 = vmatprep.subr.mxu0 0.0
    %320 = vmatpush1.msra.mxu0 0.0
    %321 = vmatprep.subr.mxu0 0.0
    %322 = vmatpush1.msra.mxu0 0.0
    %323 = vmatprep.subr.mxu0 0.0
    %324 = vmatpush1.msra.mxu0 0.0
    %325 = vmatprep.subr.mxu0 0.0
    %326 = vmatpush1.msra.mxu0 0.0
    %327 = vmatprep.subr.mxu0 0.0
    %328 = vmatpush1.msra.mxu0 0.0
    %329 = vmatprep.subr.mxu0 0.0
    %330 = vmatpush1.msra.mxu0 0.0
    %331 = vmatprep.subr.mxu0 0.0
    %332 = vmatpush1.msra.mxu0 0.0
    %333 = vmatprep.subr.mxu0 0.0
    %334 = vmatpush1.msra.mxu0 0.0
    %335 = vmatprep.subr.mxu0 0.0
    %336 = vmatpush1.msra.mxu0 0.0
    %337 = vmatprep.subr.mxu0 0.0
    %338 = vmatpush1.msra.mxu0 0.0
    %339 = vmatprep.subr.mxu0 0.0
    %340 = vmatpush1.msra.mxu0 0.0
    %341 = vmatprep.subr.mxu0 0.0
    %342 = vmatpush1.msra.mxu0 0.0
    %343 = vmatprep.subr.mxu0 0.0
    %344 = vmatpush1.msra.mxu0 0.0
    %345 = vmatprep.subr.mxu0 0.0
    %346 = vmatpush1.msra.mxu0 0.0
    %347 = vmatprep.subr.mxu0 0.0
    %348 = vmatpush1.msra.mxu0 0.0
    %349 = vmatprep.mubr.f32.mxu0 0.0
    %350 = vmatmul.mubr.f32.gmra.mrb[0].mxu0 %v280
    %v351 = vpop.f32.mrb[0].mxu0
    %v352 = vadd.f32 %v277, %v351
    %v353 = vpop.f32.mrb[0].mxu0
    %354 = vmatprep.mubr.f32.mxu0 0.0
    %355 = vmatmul.mubr.f32.gmra.mrb[0].mxu0 %v283
    %v356 = vpop.f32.mrb[0].mxu0
    %v357 = vadd.f32 %v277, %v356
    %v358 = vpop.f32.mrb[0].mxu0
    %359 = vdwg.mxu0
    %360 = vst [vmem:[#allocation14] sm:$0xff] %v352
    %361 = vst [vmem:[#allocation14 + $0x8] sm:$0xff] %v357
    // Predicated region
    $region58: #{tpu_custom_call.1} parent=1 // pred_check
      _
    $region59: #{tpu_custom_call.1} parent=1 // pred_check_branch
      %363 = sbr.rel (0) target = $region61
    $region60: #{tpu_custom_call.1} parent=1 // pred_region
      %s365 = ssub.s32 256, 256
      %366 = vsyncadd [#allocation4], %s365
      %s367 = sshll.u32 [#allocation14], 4
      %s368 = int_to_ptr.vmem [resolvable:$true] %s367
      %373 = dma.vmem_to_hbm [thread:$0]  %s368, 256, %s7, [#allocation4], 128, 128, 8
    $region61: #{tpu_custom_call.1} parent=1 // pred_fallthru
      _
    // Predicated region
    $region62: #{tpu_custom_call.1} parent=1 // pred_check
      _
    $region63: #{tpu_custom_call.1} parent=1 // pred_check_branch
      %375 = sbr.rel (0) target = $region65
    $region64: #{tpu_custom_call.1} parent=1 // pred_region
      %376 = dma.done [#allocation4], 256
    $region65: #{tpu_custom_call.1} parent=1 // pred_fallthru
      _
    %377 = vsyncpa [#allocation3], 1
    %378 = vsyncpa [#allocation6], 1
    %379 = vsyncpa [#allocation9], 1
    %380 = vsyncpa [#allocation12], 1
    %381 = vsyncpa [#allocation4], 1

</llo_original>
